<compile_context>
chip_gen: v6e
topology: v6e:2x2x1
jax: 0.10.0
libtpu: 0.0.40
codegen_flags: <defaults>
</compile_context>

<pallas_src>
import jax
import jax.numpy as jnp
from jax.experimental import pallas as pl
from jax.experimental.pallas import tpu as pltpu

LANES = 128
TARGET_BLOCK_BYTES = 2 * 1024 * 1024  # ~2 MiB per block (>=85% of HBM roofline)


def _leaky_relu_kernel(alpha_ref, x_ref, o_ref):
    x = x_ref[...]
    alpha = alpha_ref[0].astype(x.dtype)
    o_ref[...] = jnp.where(x > 0, x, alpha * x)


def _sublane_multiple(dtype) -> int:
    # Sub-32-bit dtypes pack along sublanes: 8 rows/vreg for 4-byte dtypes,
    # 16 for 2-byte (bf16), 32 for 1-byte (int8/fp8).
    itemsize = jnp.dtype(dtype).itemsize
    return 8 * max(1, 4 // itemsize)


def custom_leaky_relu(x: jax.Array, alpha: float) -> jax.Array:
    """Elementwise LeakyReLU with custom alpha, matching torch.where(x>0, x, alpha*x)."""
    orig_shape = x.shape
    dtype = x.dtype
    itemsize = jnp.dtype(dtype).itemsize

    flat = x.reshape(-1)
    n = flat.shape[0]

    # Lane-dense 2D view (rows, 128). Only pad (by < 128 elements) when the
    # total element count is not lane-aligned; the common conv-feature-map
    # case (N*C*H*W % 128 == 0) takes the copy-free path.
    rem = n % LANES
    padded = rem != 0
    if padded:
        flat = jnp.concatenate([flat, jnp.zeros((LANES - rem,), dtype=dtype)])
    rows = flat.shape[0] // LANES
    x2d = flat.reshape(rows, LANES)

    # Block rows: target ~2 MiB per block, rounded to the dtype's sublane
    # packing granularity. For small inputs shrink the block to the full row
    # count (a block equal to the full array dim is always layout-legal).
    pack = _sublane_multiple(dtype)
    target_rows = max(pack, TARGET_BLOCK_BYTES // (LANES * itemsize))
    target_rows = (target_rows // pack) * pack
    tile_rows = rows if rows <= target_rows else target_rows

    grid = (pl.cdiv(rows, tile_rows),)  # last block may be partial; Pallas masks it
    alpha_arr = jnp.asarray([alpha], dtype=jnp.float32)

    out2d = pl.pallas_call(
        _leaky_relu_kernel,
        out_shape=jax.ShapeDtypeStruct((rows, LANES), dtype),
        grid=grid,
        in_specs=[
            pl.BlockSpec(memory_space=pltpu.MemorySpace.SMEM),        # alpha scalar
            pl.BlockSpec((tile_rows, LANES), lambda i: (i, 0)),       # x tile
        ],
        out_specs=pl.BlockSpec((tile_rows, LANES), lambda i: (i, 0)),
        compiler_params=pltpu.CompilerParams(
            dimension_semantics=("parallel",),
        ),
    )(alpha_arr, x2d)

    if padded:
        # Rare misaligned case only: strip the <128-element pad.
        return out2d.reshape(-1)[:n].reshape(orig_shape)
    return out2d.reshape(orig_shape)


def reference_leaky_relu(x: jax.Array, alpha: float) -> jax.Array:
    return jnp.where(x > 0, x, alpha * x)


if __name__ == "__main__":
    key = jax.random.PRNGKey(0)
    alpha = 0.1  # module's __init__ argument

    # NCHW, like the PyTorch module's typical conv-activation usage.
    x = jax.random.normal(key, (2, 4, 16, 16), dtype=jnp.float32)
    y = jax.block_until_ready(custom_leaky_relu(x, alpha))
    y_ref = reference_leaky_relu(x, alpha)
    assert y.shape == x.shape and y.dtype == x.dtype
    assert jnp.allclose(y, y_ref, atol=1e-6, rtol=1e-6)

    # Also exercise the non-lane-aligned (padded) path with an odd shape.
    x_odd = jax.random.normal(jax.random.PRNGKey(1), (3, 5, 7, 11), dtype=jnp.float32)
    y_odd = jax.block_until_ready(custom_leaky_relu(x_odd, alpha))
    assert jnp.allclose(y_odd, reference_leaky_relu(x_odd, alpha), atol=1e-6, rtol=1e-6)

    print("KERNEL_OK")
</pallas_src>

<mosaic_0001>
module attributes {stable_mosaic.version = 11 : i64} {
  func.func @_leaky_relu_kernel(%arg0: i32, %arg1: memref<1xf32, #tpu.memory_space<smem>>, %arg2: memref<16x128xf32, #tpu.memory_space<vmem>>, %arg3: memref<16x128xf32, #tpu.memory_space<vmem>>) attributes {dimension_semantics = [#tpu.dimension_semantics<parallel>], iteration_bounds = array<i64: 1>, scalar_prefetch = 0 : i64, scratch_operands = 0 : i64, tpu.core_type = #tpu.core_type<tc>, window_params = [{transform_indices = @transform_0, window_bounds = array<i64: 1>}, {transform_indices = @transform_1, window_bounds = array<i64: 16, 128>}, {transform_indices = @transform_2, window_bounds = array<i64: 16, 128>}]} {
    %c0 = arith.constant 0 : index
    %c0_0 = arith.constant 0 : index
    %0 = vector.load %arg2[%c0, %c0_0] : memref<16x128xf32, #tpu.memory_space<vmem>>, vector<16x128xf32>
    %c0_1 = arith.constant 0 : index
    %1 = memref.load %arg1[%c0_1] : memref<1xf32, #tpu.memory_space<smem>>
    %cst = arith.constant 0.000000e+00 : f32
    %2 = vector.broadcast %cst : f32 to vector<16x128xf32>
    %3 = arith.cmpf ogt, %0, %2 : vector<16x128xf32>
    %4 = vector.broadcast %1 : f32 to vector<16x128xf32>
    %5 = arith.mulf %4, %0 : vector<16x128xf32>
    %6 = arith.select %3, %0, %5 : vector<16x128xi1>, vector<16x128xf32>
    %c0_2 = arith.constant 0 : index
    %c0_3 = arith.constant 0 : index
    %7 = vector.load %arg3[%c0_2, %c0_3] : memref<16x128xf32, #tpu.memory_space<vmem>>, vector<16x128xf32>
    tpu.vector_store %arg3[%c0_2, %c0_3], %6 {strides = array<i32>} : memref<16x128xf32, #tpu.memory_space<vmem>>, vector<16x128xf32>,
    return
  }
  func.func @transform_0(%arg0: i32) -> i32 {
    %c0_i32 = arith.constant 0 : i32
    %c0_i32_0 = arith.constant 0 : i32
    return %c0_i32 : i32
  }
  func.func @transform_1(%arg0: i32) -> (i32, i32) {
    %c0_i32 = arith.constant 0 : i32
    %c0_i32_0 = arith.constant 0 : i32
    return %arg0, %c0_i32 : i32, i32
  }
  func.func @transform_2(%arg0: i32) -> (i32, i32) {
    %c0_i32 = arith.constant 0 : i32
    %c0_i32_0 = arith.constant 0 : i32
    return %arg0, %c0_i32 : i32, i32
  }
}

</mosaic_0001>

<llo_original>
// kernel: tpu_custom_call.1
$region0: #{tpu_custom_call.1}
  #allocation0 [shape = 'u32[]', space=smem, size = 0x4, offset = 0x4, fixed_abs, tag = 'smem constant byte address 0x4 - core index']
  #allocation1 [shape = 'u32[144,128]{1,0:T(1,128)}', space=vmem, size = 0x12000, scoped, tag = 'internal scratch']
  #allocation2 [shape = 'f32[1]{0:T(128)S(6)}', space=smem, size = 0x200, scoped, tag = 'scoped memory for tpu_custom_call.1']
  %s0 = inlined_call_operand.<no memory space> [shape: f32[1], index: 0, kind: input, shape index: {}]
  %s1 = inlined_call_operand.hbm [shape: f32[16,128], index: 1, kind: input, shape index: {}]
  %s2 = inlined_call_operand.hbm [shape: f32[16,128], index: 2, kind: output, shape index: {}]
  %s3 = sld [smem:[#allocation0]]
  $region22: #{tpu_custom_call.1} parent=0
    _
  %s5 = ssub.s32 1, %s3
  %s6 = scalar_select 0, %s5, %s3
  %7 = sst [smem:[#allocation2]] %s0
  $region1: #{tpu_custom_call.1} parent=0
    #allocation3 [shape = 'u8[8192]{0}', space=vmem, size = 0x2000, scoped, tag = 'input window, operand 1, single buffered']
    #allocation4 [shape = 's32[1]{0}', space=sflag, size = 0x4, scoped, tag = 'scoped memory for tpu_custom_call.1']
    #allocation5 [shape = 's32[1]{0}', space=sflag, size = 0x4, scoped, tag = 'scoped memory for tpu_custom_call.1']
    #allocation6 [shape = 'u8[8192]{0}', space=vmem, size = 0x2000, scoped, tag = 'output window, operand 0, single buffered']
    %8 = vsyncpa [#allocation4], 0
    %9 = vsyncpa [#allocation5], 0
    // Predicated region
    $region2: #{tpu_custom_call.1} parent=1 // pred_check
      _
    $region3: #{tpu_custom_call.1} parent=1 // pred_check_branch
      %11 = sbr.rel (0) target = $region5
    $region4: #{tpu_custom_call.1} parent=1 // pred_region
      _
    $region5: #{tpu_custom_call.1} parent=1 // pred_fallthru
      _
    // Predicated region
    $region6: #{tpu_custom_call.1} parent=1 // pred_check
      _
    $region7: #{tpu_custom_call.1} parent=1 // pred_check_branch
      %13 = sbr.rel (0) target = $region9
    $region8: #{tpu_custom_call.1} parent=1 // pred_region
      %s15 = ssub.s32 256, 256
      %16 = vsyncadd [#allocation4], %s15
      %s17 = sshll.u32 [#allocation3], 4
      %s18 = int_to_ptr.vmem [resolvable:$true] %s17
      %23 = dma.hbm_to_vmem [thread:$0]  %s1, 256, %s18, [#allocation4], 128, 128, 8
    $region9: #{tpu_custom_call.1} parent=1 // pred_fallthru
      _
    // Predicated region
    $region10: #{tpu_custom_call.1} parent=1 // pred_check
      _
    $region11: #{tpu_custom_call.1} parent=1 // pred_check_branch
      %25 = sbr.rel (0) target = $region13
    $region12: #{tpu_custom_call.1} parent=1 // pred_region
      %26 = dma.done [#allocation4], 256
    $region13: #{tpu_custom_call.1} parent=1 // pred_fallthru
      _
    %v27 = vld [vmem:[#allocation3] sm:$0xff]
    %v28 = vld [vmem:[#allocation3 + $0x8] sm:$0xff]
    %s29 = sld [smem:[#allocation2]]
    %vm30 = vcmp.gt.f32.partialorder %v27, 0.0
    %vm31 = vcmp.gt.f32.partialorder %v28, 0.0
    %v32 = vstv %s29
    %v33 = vmul.f32 %v32, %v27
    %v34 = vmul.f32 %v32, %v28
    %v35 = vsel %vm30, %v27, %v33
    %v36 = vsel %vm31, %v28, %v34
    %37 = vst [vmem:[#allocation6] sm:$0xff] %v35
    %38 = vst [vmem:[#allocation6 + $0x8] sm:$0xff] %v36
    // Predicated region
    $region14: #{tpu_custom_call.1} parent=1 // pred_check
      _
    $region15: #{tpu_custom_call.1} parent=1 // pred_check_branch
      %40 = sbr.rel (0) target = $region17
    $region16: #{tpu_custom_call.1} parent=1 // pred_region
      %s42 = ssub.s32 256, 256
      %43 = vsyncadd [#allocation5], %s42
      %s44 = sshll.u32 [#allocation6], 4
      %s45 = int_to_ptr.vmem [resolvable:$true] %s44
      %50 = dma.vmem_to_hbm [thread:$0]  %s45, 256, %s2, [#allocation5], 128, 128, 8
    $region17: #{tpu_custom_call.1} parent=1 // pred_fallthru
      _
    // Predicated region
    $region18: #{tpu_custom_call.1} parent=1 // pred_check
      _
    $region19: #{tpu_custom_call.1} parent=1 // pred_check_branch
      %52 = sbr.rel (0) target = $region21
    $region20: #{tpu_custom_call.1} parent=1 // pred_region
      %53 = dma.done [#allocation5], 256
    $region21: #{tpu_custom_call.1} parent=1 // pred_fallthru
      _
    %54 = vsyncpa [#allocation4], 1
    %55 = vsyncpa [#allocation5], 1

</llo_original>
